<compile_context>
chip_gen: v7x
topology: tpu7x:2x2x1
jax: 0.10.0
libtpu: 0.0.40
codegen_flags: <defaults>
</compile_context>

<pallas_src>
import numpy as np

import jax
import jax.numpy as jnp
from jax.experimental import pallas as pl
from jax.experimental.pallas import tpu as pltpu


# ---------------------------------------------------------------------------
# helpers
# ---------------------------------------------------------------------------
def _round_up(x: int, m: int) -> int:
    return ((x + m - 1) // m) * m


def _pick_tile(n_pad: int, cap: int) -> int:
    for t in (512, 384, 256, 128):
        if t <= cap and n_pad % t == 0:
            return t
    return 128


def _vmem_capacity_bytes() -> int:
    try:
        return int(pltpu.get_tpu_info().vmem_capacity_bytes)
    except Exception:
        return 64 * 1024 * 1024  # conservative (v7x per-TensorCore)


def _pad2d(a, rows: int, cols: int):
    if a.shape == (rows, cols):
        return a  # skip the pad copy when already tile-aligned
    return jnp.pad(a, ((0, rows - a.shape[0]), (0, cols - a.shape[1])))


def _block_metadata(rows, cols, nt_m, nt_k, tm, tk):
    """Compacted per-row-tile nonzero block-column lists, built in O(nnz) on
    the host from the COO indices (no O(N^2) device reductions)."""
    if rows.size == 0:
        blk_ids = np.zeros((0,), dtype=np.int64)
    else:
        blk_ids = np.unique((rows // tm) * np.int64(nt_k) + (cols // tk))
    blk_r = (blk_ids // nt_k).astype(np.int64)
    blk_c = (blk_ids % nt_k).astype(np.int32)

    counts = np.bincount(blk_r, minlength=nt_m).astype(np.int32)
    max_blocks = max(int(counts.max()) if counts.size else 0, 1)

    cols_arr = np.zeros((nt_m, max_blocks), dtype=np.int32)
    ptr = np.zeros(nt_m + 1, dtype=np.int64)
    ptr[1:] = np.cumsum(counts)
    for i in range(nt_m):
        s, e = int(ptr[i]), int(ptr[i + 1])
        if e > s:
            cols_arr[i, : e - s] = blk_c[s:e]
            # Pad by repeating the last valid index: steps j >= count revisit
            # the same block, so Pallas issues no DMA for them.
            cols_arr[i, e - s:] = blk_c[e - 1]

    # Balance row tiles across the (up to 2) TensorCores that share the
    # "parallel" grid axis: sort by work descending, deal into both halves.
    srt = np.argsort(-counts, kind="stable").astype(np.int32)
    half = (nt_m + 1) // 2
    order = np.empty((nt_m,), dtype=np.int32)
    order[:half] = srt[0::2]
    order[half:] = srt[1::2]

    counts = counts[order]
    cols_arr = cols_arr[order]
    return (jnp.asarray(counts), jnp.asarray(cols_arr.reshape(-1)),
            jnp.asarray(order), max_blocks)


# ---------------------------------------------------------------------------
# Linear pass: H = X @ W^T + (scale *) b
# ---------------------------------------------------------------------------
def _linear_kernel(x_ref, wt_ref, b_ref, o_ref):
    x = x_ref[...].astype(wt_ref.dtype)
    acc = jnp.dot(x, wt_ref[...], preferred_element_type=jnp.float32)
    o_ref[...] = (acc + b_ref[...]).astype(o_ref.dtype)


def _linear_scaled_kernel(x_ref, wt_ref, b_ref, s_ref, o_ref):
    x = x_ref[...].astype(wt_ref.dtype)
    acc = jnp.dot(x, wt_ref[...], preferred_element_type=jnp.float32)
    o_ref[...] = (acc + s_ref[...] * b_ref[...]).astype(o_ref.dtype)


def _linear_pass(x_p, wt_p, b_p, *, out_dtype, tm, vmem_limit, bias_scale=None):
    n_rows, in_fp = x_p.shape
    out_fp = wt_p.shape[1]
    nt_m = n_rows // tm

    # Column-tile the weight only when it is large (keeps v7x VMEM in budget).
    if in_fp * out_fp * wt_p.dtype.itemsize > 8 * 2**20:
        tn = _pick_tile(out_fp, 512)
    else:
        tn = out_fp
    nt_n = out_fp // tn

    def run(use_pm):
        const_mode = (dict(pipeline_mode=pl.Buffered(1))
                      if (use_pm and nt_n == 1) else {})
        in_specs = [
            pl.BlockSpec((tm, in_fp), lambda i, j: (i, 0)),
            pl.BlockSpec((in_fp, tn), lambda i, j: (0, j), **const_mode),
            pl.BlockSpec((1, tn), lambda i, j: (0, j), **const_mode),
        ]
        args = [x_p, wt_p, b_p]
        kernel = _linear_kernel
        if bias_scale is not None:
            in_specs.append(pl.BlockSpec((tm, 1), lambda i, j: (i, 0)))
            args.append(bias_scale)
            kernel = _linear_scaled_kernel

        out = pl.pallas_call(
            kernel,
            out_shape=jax.ShapeDtypeStruct((n_rows, out_fp), out_dtype),
            grid=(nt_m, nt_n),
            in_specs=in_specs,
            out_specs=pl.BlockSpec((tm, tn), lambda i, j: (i, j)),
            compiler_params=pltpu.CompilerParams(
                dimension_semantics=("parallel", "parallel"),
                vmem_limit_bytes=vmem_limit,
            ),
        )(*args)
        return jax.block_until_ready(out)

    try:
        return run(True)
    except Exception:
        return run(False)   # fall back to default pipelining


# ---------------------------------------------------------------------------
# Aggregation pass: out = A @ H, DMA-level skipping of empty adjacency blocks
# ---------------------------------------------------------------------------
def _make_aggregate_kernel(max_blocks, tk, h_resident):
    def kernel(order_ref, counts_ref, cols_ref, adj_ref, h_ref, out_ref):
        del order_ref  # only used by the index_maps
        i = pl.program_id(0)
        j = pl.program_id(1)

        @pl.when(j == 0)
        def _():
            out_ref[...] = jnp.zeros_like(out_ref)

        @pl.when(j < counts_ref[i])
        def _():
            if h_resident:
                kb = cols_ref[i * max_blocks + j]
                h_tile = h_ref[pl.ds(pl.multiple_of(kb * tk, 128), tk), :]
            else:
                h_tile = h_ref[...]
            out_ref[...] += jnp.dot(adj_ref[...], h_tile,
                                    preferred_element_type=jnp.float32)

    return kernel


def _aggregate_pass(adj_p, h_p, order, counts, cols_flat, *,
                    tm, tk, max_blocks, vmem_limit):
    n_pad = adj_p.shape[0]
    n_rows_h, feat = h_p.shape
    nt_m = n_pad // tm

    adj_tile_bytes = tm * tk * adj_p.dtype.itemsize
    h_bytes = n_rows_h * feat * h_p.dtype.itemsize
    out_tile_bytes = tm * feat * 4

    def run(use_pm):
        h_buffers = 1 if use_pm else 2
        budget = vmem_limit - (3 * adj_tile_bytes + 2 * out_tile_bytes
                               + 4 * 2**20)
        h_resident = (h_bytes * h_buffers) <= budget

        adj_mode = dict(pipeline_mode=pl.Buffered(3)) if use_pm else {}
        if h_resident:
            h_mode = dict(pipeline_mode=pl.Buffered(1)) if use_pm else {}
            h_spec = pl.BlockSpec((n_rows_h, feat),
                                  lambda i, j, order, cnt, cols: (0, 0),
                                  **h_mode)
        else:
            h_spec = pl.BlockSpec(
                (tk, feat),
                lambda i, j, order, cnt, cols: (cols[i * max_blocks + j], 0))

        kernel = _make_aggregate_kernel(max_blocks, tk, h_resident)
        out = pl.pallas_call(
            kernel,
            out_shape=jax.ShapeDtypeStruct((n_pad, feat), jnp.float32),
            grid_spec=pltpu.PrefetchScalarGridSpec(
                num_scalar_prefetch=3,
                grid=(nt_m, max_blocks),
                in_specs=[
                    pl.BlockSpec(
                        (tm, tk),
                        lambda i, j, order, cnt, cols:
                            (order[i], cols[i * max_blocks + j]),
                        **adj_mode),
                    h_spec,
                ],
                out_specs=pl.BlockSpec(
                    (tm, feat), lambda i, j, order, cnt, cols: (order[i], 0)),
            ),
            compiler_params=pltpu.CompilerParams(
                dimension_semantics=("parallel", "arbitrary"),
                vmem_limit_bytes=vmem_limit,
            ),
        )(order, counts, cols_flat, adj_p, h_p)
        return jax.block_until_ready(out)

    try:
        return run(True)
    except Exception:
        return run(False)   # fall back to default pipelining


# ---------------------------------------------------------------------------
# GCN layer forward
# ---------------------------------------------------------------------------
def gcn_layer(x, weight, bias, adj_rows, adj_cols, adj_vals, *,
              compute_dtype=jnp.bfloat16, max_tile=512):
    """GCN layer forward:  out = A @ (X @ W^T + b)

    x        : (N, in_features)  float32
    weight   : (out_features, in_features)  float32   (nn.Linear convention)
    bias     : (out_features,)   float32
    adjacency given in COO form (adj_rows, adj_cols, adj_vals), matching the
    torch.sparse_coo input of the reference module.
    returns  : (N, out_features) float32
    """
    n, in_f = x.shape
    out_f = weight.shape[0]

    n_pad = _round_up(n, 128)
    in_fp = _round_up(in_f, 128)
    out_fp = _round_up(out_f, 128)
    tile = _pick_tile(n_pad, max_tile)
    tm = tk = tile
    nt_m = n_pad // tm
    nt_k = n_pad // tk

    vmem_cap = _vmem_capacity_bytes()
    vmem_limit = int(min(vmem_cap * 3 // 4, 96 * 2**20))

    # Host-side O(nnz) block-sparsity metadata (graph assumed static).
    rows_np = np.asarray(jax.device_get(adj_rows)).astype(np.int64)
    cols_np = np.asarray(jax.device_get(adj_cols)).astype(np.int64)
    vals_np = np.asarray(jax.device_get(adj_vals)).astype(np.float32)
    counts, cols_flat, order, max_blocks = _block_metadata(
        rows_np, cols_np, nt_m, nt_k, tm, tk)

    # Densify the (padded) adjacency once, directly in compute dtype.
    rows_d = jnp.asarray(rows_np, dtype=jnp.int32)
    cols_d = jnp.asarray(cols_np, dtype=jnp.int32)
    vals_d = jnp.asarray(vals_np)
    adj_p = jnp.zeros((n_pad, n_pad), compute_dtype).at[rows_d, cols_d].add(
        vals_d.astype(compute_dtype))

    wt_p = _pad2d(weight.T.astype(compute_dtype), in_fp, out_fp)
    b_p = _pad2d(bias.astype(jnp.float32)[None, :], 1, out_fp)

    if in_f >= out_f:
        # ---- H = X W^T + b  (once), then out = A @ H ----
        x_p = _pad2d(x.astype(compute_dtype), n_pad, in_fp)
        h = _linear_pass(x_p, wt_p, b_p, out_dtype=compute_dtype, tm=tm,
                         vmem_limit=vmem_limit)
        out_p = _aggregate_pass(adj_p, h, order, counts, cols_flat,
                                tm=tm, tk=tk, max_blocks=max_blocks,
                                vmem_limit=vmem_limit)
    else:
        # ---- re-associate:  out = (A @ X) W^T + (A @ 1) * b ----
        x_p = _pad2d(x.astype(compute_dtype), n_pad, in_fp)
        ax = _aggregate_pass(adj_p, x_p, order, counts, cols_flat,
                             tm=tm, tk=tk, max_blocks=max_blocks,
                             vmem_limit=vmem_limit)
        rowsum_np = np.zeros((n_pad,), dtype=np.float32)
        np.add.at(rowsum_np, rows_np, vals_np)           # A @ 1, O(nnz)
        rowsum = jnp.asarray(rowsum_np).reshape(n_pad, 1)
        out_p = _linear_pass(ax, wt_p, b_p, out_dtype=jnp.float32, tm=tm,
                             vmem_limit=vmem_limit, bias_scale=rowsum)

    return out_p[:n, :out_f]


def _reference(x, weight, bias, adj_dense):
    return adj_dense @ (x @ weight.T + bias)


if __name__ == "__main__":
    # Small deterministic problem: 16 nodes, ring graph with self loops.
    N, IN_F, OUT_F = 16, 32, 32
    key = jax.random.PRNGKey(0)
    k_x, k_w, k_b = jax.random.split(key, 3)

    x = jax.random.normal(k_x, (N, IN_F), dtype=jnp.float32)
    weight = jax.random.normal(k_w, (OUT_F, IN_F), dtype=jnp.float32) * 0.1
    bias = jax.random.normal(k_b, (OUT_F,), dtype=jnp.float32) * 0.1

    # Symmetrically-normalized adjacency in COO form.
    idx = np.arange(N)
    rows = np.concatenate([idx, idx, idx]).astype(np.int32)
    cols = np.concatenate([idx, (idx + 1) % N, (idx - 1) % N]).astype(np.int32)
    deg = np.full((N,), 3.0, dtype=np.float32)
    d_inv_sqrt = 1.0 / np.sqrt(deg)
    vals = (d_inv_sqrt[rows] * d_inv_sqrt[cols]).astype(np.float32)

    adj_dense = jnp.zeros((N, N), jnp.float32).at[rows, cols].add(
        jnp.asarray(vals))
    ref = _reference(x, weight, bias, adj_dense)

    # f32 compute path (validation).
    out_f32 = jax.block_until_ready(
        gcn_layer(x, weight, bias, rows, cols, vals,
                  compute_dtype=jnp.float32))
    assert out_f32.shape == (N, OUT_F)
    assert jnp.allclose(out_f32, ref, atol=1e-2, rtol=1e-2)

    # Default fast path: bf16 inputs, f32 accumulation.
    out_bf16 = jax.block_until_ready(
        gcn_layer(x, weight, bias, rows, cols, vals))
    assert out_bf16.shape == (N, OUT_F)
    assert jnp.allclose(out_bf16, ref, atol=3e-2, rtol=3e-2)

    # Expanding layer (in_f < out_f) exercises the re-associated (A@X)W^T path.
    IN2, OUT2 = 16, 64
    k_x2, k_w2, k_b2 = jax.random.split(jax.random.PRNGKey(1), 3)
    x2 = jax.random.normal(k_x2, (N, IN2), dtype=jnp.float32)
    w2 = jax.random.normal(k_w2, (OUT2, IN2), dtype=jnp.float32) * 0.1
    b2 = jax.random.normal(k_b2, (OUT2,), dtype=jnp.float32) * 0.1
    ref2 = _reference(x2, w2, b2, adj_dense)
    out2 = jax.block_until_ready(
        gcn_layer(x2, w2, b2, rows, cols, vals, compute_dtype=jnp.float32))
    assert out2.shape == (N, OUT2)
    assert jnp.allclose(out2, ref2, atol=1e-2, rtol=1e-2)

    print("KERNEL_OK")
</pallas_src>

<mosaic_0001>
module attributes {stable_mosaic.version = 11 : i64} {
  func.func @_linear_kernel(%arg0: i32, %arg1: i32, %arg2: memref<128x128xf32, #tpu.memory_space<vmem>>, %arg3: memref<128x128xf32, #tpu.memory_space<vmem>>, %arg4: memref<1x128xf32, #tpu.memory_space<vmem>>, %arg5: memref<128x128xf32, #tpu.memory_space<vmem>>) attributes {dimension_semantics = [#tpu.dimension_semantics<parallel>, #tpu.dimension_semantics<parallel>], iteration_bounds = array<i64: 1, 1>, scalar_prefetch = 0 : i64, scratch_operands = 0 : i64, tpu.core_type = #tpu.core_type<tc>, window_params = [{transform_indices = @transform_0, window_bounds = array<i64: 128, 128>}, {pipeline_mode = #tpu.pipeline_mode<synchronous>, transform_indices = @transform_1, window_bounds = array<i64: 128, 128>}, {pipeline_mode = #tpu.pipeline_mode<synchronous>, transform_indices = @transform_2, window_bounds = array<i64: 1, 128>}, {transform_indices = @transform_3, window_bounds = array<i64: 128, 128>}]} {
    %c0 = arith.constant 0 : index
    %c0_0 = arith.constant 0 : index
    %0 = vector.load %arg2[%c0, %c0_0] : memref<128x128xf32, #tpu.memory_space<vmem>>, vector<128x128xf32>
    %c0_1 = arith.constant 0 : index
    %c0_2 = arith.constant 0 : index
    %1 = vector.load %arg3[%c0_1, %c0_2] : memref<128x128xf32, #tpu.memory_space<vmem>>, vector<128x128xf32>
    %cst = arith.constant dense<0.000000e+00> : vector<128x128xf32>
    %2 = tpu.matmul %0, %1, %cst {dimension_numbers = #tpu.dot_dimension_numbers<[1], [0], [0], [1], [0, 0, 1, 1], [], []>} : vector<128x128xf32>, vector<128x128xf32>, vector<128x128xf32> -> vector<128x128xf32>
    %c0_3 = arith.constant 0 : index
    %c0_4 = arith.constant 0 : index
    %3 = vector.load %arg4[%c0_3, %c0_4] : memref<1x128xf32, #tpu.memory_space<vmem>>, vector<1x128xf32>
    %4 = vector.broadcast %3 : vector<1x128xf32> to vector<128x128xf32>
    %5 = arith.addf %2, %4 : vector<128x128xf32>
    %c0_5 = arith.constant 0 : index
    %c0_6 = arith.constant 0 : index
    %6 = vector.load %arg5[%c0_5, %c0_6] : memref<128x128xf32, #tpu.memory_space<vmem>>, vector<128x128xf32>
    tpu.vector_store %arg5[%c0_5, %c0_6], %5 {strides = array<i32>} : memref<128x128xf32, #tpu.memory_space<vmem>>, vector<128x128xf32>,
    return
  }
  func.func @transform_0(%arg0: i32, %arg1: i32) -> (i32, i32) {
    %c0_i32 = arith.constant 0 : i32
    %c0_i32_0 = arith.constant 0 : i32
    return %arg0, %c0_i32 : i32, i32
  }
  func.func @transform_1(%arg0: i32, %arg1: i32) -> (i32, i32) {
    %c0_i32 = arith.constant 0 : i32
    %c0_i32_0 = arith.constant 0 : i32
    return %c0_i32, %arg1 : i32, i32
  }
  func.func @transform_2(%arg0: i32, %arg1: i32) -> (i32, i32) {
    %c0_i32 = arith.constant 0 : i32
    %c0_i32_0 = arith.constant 0 : i32
    return %c0_i32, %arg1 : i32, i32
  }
  func.func @transform_3(%arg0: i32, %arg1: i32) -> (i32, i32) {
    %c0_i32 = arith.constant 0 : i32
    return %arg0, %arg1 : i32, i32
  }
}

module attributes {stable_mosaic.version = 11 : i64} {
  func.func @_linear_kernel(%arg0: i32, %arg1: i32, %arg2: memref<128x128xf32, #tpu.memory_space<vmem>>, %arg3: memref<128x128xf32, #tpu.memory_space<vmem>>, %arg4: memref<1x128xf32, #tpu.memory_space<vmem>>, %arg5: memref<128x128xf32, #tpu.memory_space<vmem>>) attributes {dimension_semantics = [#tpu.dimension_semantics<parallel>, #tpu.dimension_semantics<parallel>], iteration_bounds = array<i64: 1, 1>, scalar_prefetch = 0 : i64, scratch_operands = 0 : i64, tpu.core_type = #tpu.core_type<tc>, window_params = [{transform_indices = @transform_0, window_bounds = array<i64: 128, 128>}, {transform_indices = @transform_1, window_bounds = array<i64: 128, 128>}, {transform_indices = @transform_2, window_bounds = array<i64: 1, 128>}, {transform_indices = @transform_3, window_bounds = array<i64: 128, 128>}]} {
    %c0 = arith.constant 0 : index
    %c0_0 = arith.constant 0 : index
    %0 = vector.load %arg2[%c0, %c0_0] : memref<128x128xf32, #tpu.memory_space<vmem>>, vector<128x128xf32>
    %c0_1 = arith.constant 0 : index
    %c0_2 = arith.constant 0 : index
    %1 = vector.load %arg3[%c0_1, %c0_2] : memref<128x128xf32, #tpu.memory_space<vmem>>, vector<128x128xf32>
    %cst = arith.constant dense<0.000000e+00> : vector<128x128xf32>
    %2 = tpu.matmul %0, %1, %cst {dimension_numbers = #tpu.dot_dimension_numbers<[1], [0], [0], [1], [0, 0, 1, 1], [], []>} : vector<128x128xf32>, vector<128x128xf32>, vector<128x128xf32> -> vector<128x128xf32>
    %c0_3 = arith.constant 0 : index
    %c0_4 = arith.constant 0 : index
    %3 = vector.load %arg4[%c0_3, %c0_4] : memref<1x128xf32, #tpu.memory_space<vmem>>, vector<1x128xf32>
    %4 = vector.broadcast %3 : vector<1x128xf32> to vector<128x128xf32>
    %5 = arith.addf %2, %4 : vector<128x128xf32>
    %c0_5 = arith.constant 0 : index
    %c0_6 = arith.constant 0 : index
    %6 = vector.load %arg5[%c0_5, %c0_6] : memref<128x128xf32, #tpu.memory_space<vmem>>, vector<128x128xf32>
    tpu.vector_store %arg5[%c0_5, %c0_6], %5 {strides = array<i32>} : memref<128x128xf32, #tpu.memory_space<vmem>>, vector<128x128xf32>,
    return
  }
  func.func @transform_0(%arg0: i32, %arg1: i32) -> (i32, i32) {
    %c0_i32 = arith.constant 0 : i32
    %c0_i32_0 = arith.constant 0 : i32
    return %arg0, %c0_i32 : i32, i32
  }
  func.func @transform_1(%arg0: i32, %arg1: i32) -> (i32, i32) {
    %c0_i32 = arith.constant 0 : i32
    %c0_i32_0 = arith.constant 0 : i32
    return %c0_i32, %arg1 : i32, i32
  }
  func.func @transform_2(%arg0: i32, %arg1: i32) -> (i32, i32) {
    %c0_i32 = arith.constant 0 : i32
    %c0_i32_0 = arith.constant 0 : i32
    return %c0_i32, %arg1 : i32, i32
  }
  func.func @transform_3(%arg0: i32, %arg1: i32) -> (i32, i32) {
    %c0_i32 = arith.constant 0 : i32
    return %arg0, %arg1 : i32, i32
  }
}

</mosaic_0001>

<llo_original>
// kernel: tpu_custom_call.1
$region0: #{tpu_custom_call.1}
  #allocation0 [shape = 'u32[]', space=smem, size = 0x4, offset = 0x4, fixed_abs, tag = 'smem constant byte address 0x4 - core index']
  #allocation1 [shape = 'u32[144,128]{1,0:T(1,128)}', space=vmem, size = 0x12000, scoped, tag = 'internal scratch']
  %s0 = inlined_call_operand.hbm [shape: f32[128,128], index: 0, kind: input, shape index: {}]
  %s1 = inlined_call_operand.hbm [shape: f32[128,128], index: 1, kind: input, shape index: {}]
  %s2 = inlined_call_operand.vmem [shape: f32[1,128], index: 2, kind: input, shape index: {}]
  %s3 = inlined_call_operand.hbm [shape: f32[128,128], index: 3, kind: output, shape index: {}]
  %s4 = sld [smem:[#allocation0]]
  $region30: #{tpu_custom_call.1} parent=0
    _
  %s6 = ssub.s32 1, %s4
  %s7 = scalar_select 0, %s6, %s4
  $region1: #{tpu_custom_call.1} parent=0
    #allocation2 [shape = 'u8[65536]{0}', space=vmem, size = 0x10000, scoped, tag = 'input window, operand 0, single buffered']
    #allocation3 [shape = 's32[1]{0}', space=sflag, size = 0x4, scoped, tag = 'scoped memory for tpu_custom_call.1']
    #allocation4 [shape = 's32[1]{0}', space=sflag, size = 0x4, scoped, tag = 'scoped memory for tpu_custom_call.1']
    #allocation5 [shape = 'u8[65536]{0}', space=vmem, size = 0x10000, scoped, tag = 'input window, operand 1, single buffered']
    #allocation6 [shape = 's32[1]{0}', space=sflag, size = 0x4, scoped, tag = 'scoped memory for tpu_custom_call.1']
    #allocation7 [shape = 'u8[65536]{0}', space=vmem, size = 0x10000, scoped, tag = 'output window, operand 0, single buffered']
    %8 = vsyncpa [#allocation3], 0
    %9 = vsyncpa [#allocation6], 0
    %10 = vsyncpa [#allocation4], 0
    // Predicated region
    $region2: #{tpu_custom_call.1} parent=1 // pred_check
      _
    $region3: #{tpu_custom_call.1} parent=1 // pred_check_branch
      %12 = sbr.rel (0) target = $region5
    $region4: #{tpu_custom_call.1} parent=1 // pred_region
      %s14 = ssub.s32 2048, 2048
      %15 = vsyncadd [#allocation3], %s14
      %s16 = sshll.u32 [#allocation2], 4
      %s17 = int_to_ptr.vmem [resolvable:$true] %s16
      %22 = dma.hbm_to_vmem [thread:$0]  %s0, 2048, %s17, [#allocation3], 128, 128, 8
    $region5: #{tpu_custom_call.1} parent=1 // pred_fallthru
      _
    // Predicated region
    $region6: #{tpu_custom_call.1} parent=1 // pred_check
      _
    $region7: #{tpu_custom_call.1} parent=1 // pred_check_branch
      %24 = sbr.rel (0) target = $region9
    $region8: #{tpu_custom_call.1} parent=1 // pred_region
      %s26 = ssub.s32 2048, 2048
      %27 = vsyncadd [#allocation6], %s26
      %s28 = sshll.u32 [#allocation5], 4
      %s29 = int_to_ptr.vmem [resolvable:$true] %s28
      %34 = dma.hbm_to_vmem [thread:$0]  %s1, 2048, %s29, [#allocation6], 128, 128, 8
    $region9: #{tpu_custom_call.1} parent=1 // pred_fallthru
      _
    // Predicated region
    $region10: #{tpu_custom_call.1} parent=1 // pred_check
      _
    $region11: #{tpu_custom_call.1} parent=1 // pred_check_branch
      %36 = sbr.rel (0) target = $region13
    $region12: #{tpu_custom_call.1} parent=1 // pred_region
      _
    $region13: #{tpu_custom_call.1} parent=1 // pred_fallthru
      _
    // Predicated region
    $region14: #{tpu_custom_call.1} parent=1 // pred_check
      _
    $region15: #{tpu_custom_call.1} parent=1 // pred_check_branch
      %38 = sbr.rel (0) target = $region17
    $region16: #{tpu_custom_call.1} parent=1 // pred_region
      %39 = dma.done [#allocation3], 2048
    $region17: #{tpu_custom_call.1} parent=1 // pred_fallthru
      _
    // Predicated region
    $region18: #{tpu_custom_call.1} parent=1 // pred_check
      _
    $region19: #{tpu_custom_call.1} parent=1 // pred_check_branch
      %41 = sbr.rel (0) target = $region21
    $region20: #{tpu_custom_call.1} parent=1 // pred_region
      %42 = dma.done [#allocation6], 2048
    $region21: #{tpu_custom_call.1} parent=1 // pred_fallthru
      _
    %v43 = vld [vmem:[#allocation2] sm:$0xff]
    %v44 = vld [vmem:[#allocation2 + $0x8] sm:$0xff]
    %v45 = vld [vmem:[#allocation2 + $0x10] sm:$0xff]
    %v46 = vld [vmem:[#allocation2 + $0x18] sm:$0xff]
    %v47 = vld [vmem:[#allocation2 + $0x20] sm:$0xff]
    %v48 = vld [vmem:[#allocation2 + $0x28] sm:$0xff]
    %v49 = vld [vmem:[#allocation2 + $0x30] sm:$0xff]
    %v50 = vld [vmem:[#allocation2 + $0x38] sm:$0xff]
    %v51 = vld [vmem:[#allocation2 + $0x40] sm:$0xff]
    %v52 = vld [vmem:[#allocation2 + $0x48] sm:$0xff]
    %v53 = vld [vmem:[#allocation2 + $0x50] sm:$0xff]
    %v54 = vld [vmem:[#allocation2 + $0x58] sm:$0xff]
    %v55 = vld [vmem:[#allocation2 + $0x60] sm:$0xff]
    %v56 = vld [vmem:[#allocation2 + $0x68] sm:$0xff]
    %v57 = vld [vmem:[#allocation2 + $0x70] sm:$0xff]
    %v58 = vld [vmem:[#allocation2 + $0x78] sm:$0xff]
    %v59 = vld [vmem:[#allocation5] sm:$0xff]
    %v60 = vld [vmem:[#allocation5 + $0x8] sm:$0xff]
    %v61 = vld [vmem:[#allocation5 + $0x10] sm:$0xff]
    %v62 = vld [vmem:[#allocation5 + $0x18] sm:$0xff]
    %v63 = vld [vmem:[#allocation5 + $0x20] sm:$0xff]
    %v64 = vld [vmem:[#allocation5 + $0x28] sm:$0xff]
    %v65 = vld [vmem:[#allocation5 + $0x30] sm:$0xff]
    %v66 = vld [vmem:[#allocation5 + $0x38] sm:$0xff]
    %v67 = vld [vmem:[#allocation5 + $0x40] sm:$0xff]
    %v68 = vld [vmem:[#allocation5 + $0x48] sm:$0xff]
    %v69 = vld [vmem:[#allocation5 + $0x50] sm:$0xff]
    %v70 = vld [vmem:[#allocation5 + $0x58] sm:$0xff]
    %v71 = vld [vmem:[#allocation5 + $0x60] sm:$0xff]
    %v72 = vld [vmem:[#allocation5 + $0x68] sm:$0xff]
    %v73 = vld [vmem:[#allocation5 + $0x70] sm:$0xff]
    %v74 = vld [vmem:[#allocation5 + $0x78] sm:$0xff]
    %v75 = vld [vmem:[%s2] sm:$0x1]
    %v77 = vlaneseq
    %v78 = vshrl.u32 %v77, 7
    %v79 = vsub.s32 0, %v78
    %v80 = vrot.slane %v75, %v79
    %82 = vmatprep.subr.mxu0 0.0
    %83 = vmatpush1.msra.mxu0 %v59
    %84 = vmatprep.subr.mxu0 0.0
    %85 = vmatpush1.msra.mxu0 %v60
    %86 = vmatprep.subr.mxu0 0.0
    %87 = vmatpush1.msra.mxu0 %v61
    %88 = vmatprep.subr.mxu0 0.0
    %89 = vmatpush1.msra.mxu0 %v62
    %90 = vmatprep.subr.mxu0 0.0
    %91 = vmatpush1.msra.mxu0 %v63
    %92 = vmatprep.subr.mxu0 0.0
    %93 = vmatpush1.msra.mxu0 %v64
    %94 = vmatprep.subr.mxu0 0.0
    %95 = vmatpush1.msra.mxu0 %v65
    %96 = vmatprep.subr.mxu0 0.0
    %97 = vmatpush1.msra.mxu0 %v66
    %98 = vmatprep.subr.mxu0 0.0
    %99 = vmatpush1.msra.mxu0 %v67
    %100 = vmatprep.subr.mxu0 0.0
    %101 = vmatpush1.msra.mxu0 %v68
    %102 = vmatprep.subr.mxu0 0.0
    %103 = vmatpush1.msra.mxu0 %v69
    %104 = vmatprep.subr.mxu0 0.0
    %105 = vmatpush1.msra.mxu0 %v70
    %106 = vmatprep.subr.mxu0 0.0
    %107 = vmatpush1.msra.mxu0 %v71
    %108 = vmatprep.subr.mxu0 0.0
    %109 = vmatpush1.msra.mxu0 %v72
    %110 = vmatprep.subr.mxu0 0.0
    %111 = vmatpush1.msra.mxu0 %v73
    %112 = vmatprep.subr.mxu0 0.0
    %113 = vmatpush1.msra.mxu0 %v74
    %114 = vmatprep.subr.mxu0 0.0
    %115 = vmatpush1.msra.mxu0 0.0
    %116 = vmatprep.subr.mxu0 0.0
    %117 = vmatpush1.msra.mxu0 0.0
    %118 = vmatprep.subr.mxu0 0.0
    %119 = vmatpush1.msra.mxu0 0.0
    %120 = vmatprep.subr.mxu0 0.0
    %121 = vmatpush1.msra.mxu0 0.0
    %122 = vmatprep.subr.mxu0 0.0
    %123 = vmatpush1.msra.mxu0 0.0
    %124 = vmatprep.subr.mxu0 0.0
    %125 = vmatpush1.msra.mxu0 0.0
    %126 = vmatprep.subr.mxu0 0.0
    %127 = vmatpush1.msra.mxu0 0.0
    %128 = vmatprep.subr.mxu0 0.0
    %129 = vmatpush1.msra.mxu0 0.0
    %130 = vmatprep.subr.mxu0 0.0
    %131 = vmatpush1.msra.mxu0 0.0
    %132 = vmatprep.subr.mxu0 0.0
    %133 = vmatpush1.msra.mxu0 0.0
    %134 = vmatprep.subr.mxu0 0.0
    %135 = vmatpush1.msra.mxu0 0.0
    %136 = vmatprep.subr.mxu0 0.0
    %137 = vmatpush1.msra.mxu0 0.0
    %138 = vmatprep.subr.mxu0 0.0
    %139 = vmatpush1.msra.mxu0 0.0
    %140 = vmatprep.subr.mxu0 0.0
    %141 = vmatpush1.msra.mxu0 0.0
    %142 = vmatprep.subr.mxu0 0.0
    %143 = vmatpush1.msra.mxu0 0.0
    %144 = vmatprep.subr.mxu0 0.0
    %145 = vmatpush1.msra.mxu0 0.0
    %146 = vmatprep.mubr.f32.mxu0 0.0
    %147 = vmatmul.mubr.f32.gmra.mrb[0].mxu0 %v43
    %v148 = vpop.f32.mrb[0].mxu0
    %v149 = vadd.f32 %v80, %v148
    %v150 = vpop.f32.mrb[0].mxu0
    %151 = vmatprep.mubr.f32.mxu0 0.0
    %152 = vmatmul.mubr.f32.gmra.mrb[0].mxu0 %v44
    %v153 = vpop.f32.mrb[0].mxu0
    %v154 = vadd.f32 %v80, %v153
    %v155 = vpop.f32.mrb[0].mxu0
    %156 = vmatprep.mubr.f32.mxu0 0.0
    %157 = vmatmul.mubr.f32.gmra.mrb[0].mxu0 %v45
    %v158 = vpop.f32.mrb[0].mxu0
    %v159 = vadd.f32 %v80, %v158
    %v160 = vpop.f32.mrb[0].mxu0
    %161 = vmatprep.mubr.f32.mxu0 0.0
    %162 = vmatmul.mubr.f32.gmra.mrb[0].mxu0 %v46
    %v163 = vpop.f32.mrb[0].mxu0
    %v164 = vadd.f32 %v80, %v163
    %v165 = vpop.f32.mrb[0].mxu0
    %166 = vmatprep.mubr.f32.mxu0 0.0
    %167 = vmatmul.mubr.f32.gmra.mrb[0].mxu0 %v47
    %v168 = vpop.f32.mrb[0].mxu0
    %v169 = vadd.f32 %v80, %v168
    %v170 = vpop.f32.mrb[0].mxu0
    %171 = vmatprep.mubr.f32.mxu0 0.0
    %172 = vmatmul.mubr.f32.gmra.mrb[0].mxu0 %v48
    %v173 = vpop.f32.mrb[0].mxu0
    %v174 = vadd.f32 %v80, %v173
    %v175 = vpop.f32.mrb[0].mxu0
    %176 = vmatprep.mubr.f32.mxu0 0.0
    %177 = vmatmul.mubr.f32.gmra.mrb[0].mxu0 %v49
    %v178 = vpop.f32.mrb[0].mxu0
    %v179 = vadd.f32 %v80, %v178
    %v180 = vpop.f32.mrb[0].mxu0
    %181 = vmatprep.mubr.f32.mxu0 0.0
    %182 = vmatmul.mubr.f32.gmra.mrb[0].mxu0 %v50
    %v183 = vpop.f32.mrb[0].mxu0
    %v184 = vadd.f32 %v80, %v183
    %v185 = vpop.f32.mrb[0].mxu0
    %186 = vmatprep.mubr.f32.mxu0 0.0
    %187 = vmatmul.mubr.f32.gmra.mrb[0].mxu0 %v51
    %v188 = vpop.f32.mrb[0].mxu0
    %v189 = vadd.f32 %v80, %v188
    %v190 = vpop.f32.mrb[0].mxu0
    %191 = vmatprep.mubr.f32.mxu0 0.0
    %192 = vmatmul.mubr.f32.gmra.mrb[0].mxu0 %v52
    %v193 = vpop.f32.mrb[0].mxu0
    %v194 = vadd.f32 %v80, %v193
    %v195 = vpop.f32.mrb[0].mxu0
    %196 = vmatprep.mubr.f32.mxu0 0.0
    %197 = vmatmul.mubr.f32.gmra.mrb[0].mxu0 %v53
    %v198 = vpop.f32.mrb[0].mxu0
    %v199 = vadd.f32 %v80, %v198
    %v200 = vpop.f32.mrb[0].mxu0
    %201 = vmatprep.mubr.f32.mxu0 0.0
    %202 = vmatmul.mubr.f32.gmra.mrb[0].mxu0 %v54
    %v203 = vpop.f32.mrb[0].mxu0
    %v204 = vadd.f32 %v80, %v203
    %v205 = vpop.f32.mrb[0].mxu0
    %206 = vmatprep.mubr.f32.mxu0 0.0
    %207 = vmatmul.mubr.f32.gmra.mrb[0].mxu0 %v55
    %v208 = vpop.f32.mrb[0].mxu0
    %v209 = vadd.f32 %v80, %v208
    %v210 = vpop.f32.mrb[0].mxu0
    %211 = vmatprep.mubr.f32.mxu0 0.0
    %212 = vmatmul.mubr.f32.gmra.mrb[0].mxu0 %v56
    %v213 = vpop.f32.mrb[0].mxu0
    %v214 = vadd.f32 %v80, %v213
    %v215 = vpop.f32.mrb[0].mxu0
    %216 = vmatprep.mubr.f32.mxu0 0.0
    %217 = vmatmul.mubr.f32.gmra.mrb[0].mxu0 %v57
    %v218 = vpop.f32.mrb[0].mxu0
    %v219 = vadd.f32 %v80, %v218
    %v220 = vpop.f32.mrb[0].mxu0
    %221 = vmatprep.mubr.f32.mxu0 0.0
    %222 = vmatmul.mubr.f32.gmra.mrb[0].mxu0 %v58
    %v223 = vpop.f32.mrb[0].mxu0
    %v224 = vadd.f32 %v80, %v223
    %v225 = vpop.f32.mrb[0].mxu0
    %226 = vdwg.mxu0
    %227 = vst [vmem:[#allocation7] sm:$0xff] %v149
    %228 = vst [vmem:[#allocation7 + $0x8] sm:$0xff] %v154
    %229 = vst [vmem:[#allocation7 + $0x10] sm:$0xff] %v159
    %230 = vst [vmem:[#allocation7 + $0x18] sm:$0xff] %v164
    %231 = vst [vmem:[#allocation7 + $0x20] sm:$0xff] %v169
    %232 = vst [vmem:[#allocation7 + $0x28] sm:$0xff] %v174
    %233 = vst [vmem:[#allocation7 + $0x30] sm:$0xff] %v179
    %234 = vst [vmem:[#allocation7 + $0x38] sm:$0xff] %v184
    %235 = vst [vmem:[#allocation7 + $0x40] sm:$0xff] %v189
    %236 = vst [vmem:[#allocation7 + $0x48] sm:$0xff] %v194
    %237 = vst [vmem:[#allocation7 + $0x50] sm:$0xff] %v199
    %238 = vst [vmem:[#allocation7 + $0x58] sm:$0xff] %v204
    %239 = vst [vmem:[#allocation7 + $0x60] sm:$0xff] %v209
    %240 = vst [vmem:[#allocation7 + $0x68] sm:$0xff] %v214
    %241 = vst [vmem:[#allocation7 + $0x70] sm:$0xff] %v219
    %242 = vst [vmem:[#allocation7 + $0x78] sm:$0xff] %v224
    // Predicated region
    $region22: #{tpu_custom_call.1} parent=1 // pred_check
      _
    $region23: #{tpu_custom_call.1} parent=1 // pred_check_branch
      %244 = sbr.rel (0) target = $region25
    $region24: #{tpu_custom_call.1} parent=1 // pred_region
      %s246 = ssub.s32 2048, 2048
      %247 = vsyncadd [#allocation4], %s246
      %s248 = sshll.u32 [#allocation7], 4
      %s249 = int_to_ptr.vmem [resolvable:$true] %s248
      %254 = dma.vmem_to_hbm [thread:$0]  %s249, 2048, %s3, [#allocation4], 128, 128, 8
    $region25: #{tpu_custom_call.1} parent=1 // pred_fallthru
      _
    // Predicated region
    $region26: #{tpu_custom_call.1} parent=1 // pred_check
      _
    $region27: #{tpu_custom_call.1} parent=1 // pred_check_branch
      %256 = sbr.rel (0) target = $region29
    $region28: #{tpu_custom_call.1} parent=1 // pred_region
      %257 = dma.done [#allocation4], 2048
    $region29: #{tpu_custom_call.1} parent=1 // pred_fallthru
      _
    %258 = vsyncpa [#allocation3], 1
    %259 = vsyncpa [#allocation6], 1
    %260 = vsyncpa [#allocation4], 1

// kernel: tpu_custom_call.1
$region0: #{tpu_custom_call.1}
  #allocation0 [shape = 'u32[]', space=smem, size = 0x4, offset = 0x4, fixed_abs, tag = 'smem constant byte address 0x4 - core index']
  #allocation1 [shape = 'u32[144,128]{1,0:T(1,128)}', space=vmem, size = 0x12000, scoped, tag = 'internal scratch']
  %s0 = inlined_call_operand.hbm [shape: f32[128,128], index: 0, kind: input, shape index: {}]
  %s1 = inlined_call_operand.hbm [shape: f32[128,128], index: 1, kind: input, shape index: {}]
  %s2 = inlined_call_operand.vmem [shape: f32[1,128], index: 2, kind: input, shape index: {}]
  %s3 = inlined_call_operand.hbm [shape: f32[128,128], index: 3, kind: output, shape index: {}]
  %s4 = sld [smem:[#allocation0]]
  $region30: #{tpu_custom_call.1} parent=0
    _
  %s6 = ssub.s32 1, %s4
  %s7 = scalar_select 0, %s6, %s4
  $region1: #{tpu_custom_call.1} parent=0
    #allocation2 [shape = 'u8[65536]{0}', space=vmem, size = 0x10000, scoped, tag = 'input window, operand 0, single buffered']
    #allocation3 [shape = 's32[1]{0}', space=sflag, size = 0x4, scoped, tag = 'scoped memory for tpu_custom_call.1']
    #allocation4 [shape = 's32[1]{0}', space=sflag, size = 0x4, scoped, tag = 'scoped memory for tpu_custom_call.1']
    #allocation5 [shape = 'u8[65536]{0}', space=vmem, size = 0x10000, scoped, tag = 'input window, operand 1, single buffered']
    #allocation6 [shape = 's32[1]{0}', space=sflag, size = 0x4, scoped, tag = 'scoped memory for tpu_custom_call.1']
    #allocation7 [shape = 'u8[65536]{0}', space=vmem, size = 0x10000, scoped, tag = 'output window, operand 0, single buffered']
    %8 = vsyncpa [#allocation3], 0
    %9 = vsyncpa [#allocation6], 0
    %10 = vsyncpa [#allocation4], 0
    // Predicated region
    $region2: #{tpu_custom_call.1} parent=1 // pred_check
      _
    $region3: #{tpu_custom_call.1} parent=1 // pred_check_branch
      %12 = sbr.rel (0) target = $region5
    $region4: #{tpu_custom_call.1} parent=1 // pred_region
      %s14 = ssub.s32 2048, 2048
      %15 = vsyncadd [#allocation3], %s14
      %s16 = sshll.u32 [#allocation2], 4
      %s17 = int_to_ptr.vmem [resolvable:$true] %s16
      %22 = dma.hbm_to_vmem [thread:$0]  %s0, 2048, %s17, [#allocation3], 128, 128, 8
    $region5: #{tpu_custom_call.1} parent=1 // pred_fallthru
      _
    // Predicated region
    $region6: #{tpu_custom_call.1} parent=1 // pred_check
      _
    $region7: #{tpu_custom_call.1} parent=1 // pred_check_branch
      %24 = sbr.rel (0) target = $region9
    $region8: #{tpu_custom_call.1} parent=1 // pred_region
      %s26 = ssub.s32 2048, 2048
      %27 = vsyncadd [#allocation6], %s26
      %s28 = sshll.u32 [#allocation5], 4
      %s29 = int_to_ptr.vmem [resolvable:$true] %s28
      %34 = dma.hbm_to_vmem [thread:$0]  %s1, 2048, %s29, [#allocation6], 128, 128, 8
    $region9: #{tpu_custom_call.1} parent=1 // pred_fallthru
      _
    // Predicated region
    $region10: #{tpu_custom_call.1} parent=1 // pred_check
      _
    $region11: #{tpu_custom_call.1} parent=1 // pred_check_branch
      %36 = sbr.rel (0) target = $region13
    $region12: #{tpu_custom_call.1} parent=1 // pred_region
      _
    $region13: #{tpu_custom_call.1} parent=1 // pred_fallthru
      _
    // Predicated region
    $region14: #{tpu_custom_call.1} parent=1 // pred_check
      _
    $region15: #{tpu_custom_call.1} parent=1 // pred_check_branch
      %38 = sbr.rel (0) target = $region17
    $region16: #{tpu_custom_call.1} parent=1 // pred_region
      %39 = dma.done [#allocation3], 2048
    $region17: #{tpu_custom_call.1} parent=1 // pred_fallthru
      _
    // Predicated region
    $region18: #{tpu_custom_call.1} parent=1 // pred_check
      _
    $region19: #{tpu_custom_call.1} parent=1 // pred_check_branch
      %41 = sbr.rel (0) target = $region21
    $region20: #{tpu_custom_call.1} parent=1 // pred_region
      %42 = dma.done [#allocation6], 2048
    $region21: #{tpu_custom_call.1} parent=1 // pred_fallthru
      _
    %v43 = vld [vmem:[#allocation2] sm:$0xff]
    %v44 = vld [vmem:[#allocation2 + $0x8] sm:$0xff]
    %v45 = vld [vmem:[#allocation2 + $0x10] sm:$0xff]
    %v46 = vld [vmem:[#allocation2 + $0x18] sm:$0xff]
    %v47 = vld [vmem:[#allocation2 + $0x20] sm:$0xff]
    %v48 = vld [vmem:[#allocation2 + $0x28] sm:$0xff]
    %v49 = vld [vmem:[#allocation2 + $0x30] sm:$0xff]
    %v50 = vld [vmem:[#allocation2 + $0x38] sm:$0xff]
    %v51 = vld [vmem:[#allocation2 + $0x40] sm:$0xff]
    %v52 = vld [vmem:[#allocation2 + $0x48] sm:$0xff]
    %v53 = vld [vmem:[#allocation2 + $0x50] sm:$0xff]
    %v54 = vld [vmem:[#allocation2 + $0x58] sm:$0xff]
    %v55 = vld [vmem:[#allocation2 + $0x60] sm:$0xff]
    %v56 = vld [vmem:[#allocation2 + $0x68] sm:$0xff]
    %v57 = vld [vmem:[#allocation2 + $0x70] sm:$0xff]
    %v58 = vld [vmem:[#allocation2 + $0x78] sm:$0xff]
    %v59 = vld [vmem:[#allocation5] sm:$0xff]
    %v60 = vld [vmem:[#allocation5 + $0x8] sm:$0xff]
    %v61 = vld [vmem:[#allocation5 + $0x10] sm:$0xff]
    %v62 = vld [vmem:[#allocation5 + $0x18] sm:$0xff]
    %v63 = vld [vmem:[#allocation5 + $0x20] sm:$0xff]
    %v64 = vld [vmem:[#allocation5 + $0x28] sm:$0xff]
    %v65 = vld [vmem:[#allocation5 + $0x30] sm:$0xff]
    %v66 = vld [vmem:[#allocation5 + $0x38] sm:$0xff]
    %v67 = vld [vmem:[#allocation5 + $0x40] sm:$0xff]
    %v68 = vld [vmem:[#allocation5 + $0x48] sm:$0xff]
    %v69 = vld [vmem:[#allocation5 + $0x50] sm:$0xff]
    %v70 = vld [vmem:[#allocation5 + $0x58] sm:$0xff]
    %v71 = vld [vmem:[#allocation5 + $0x60] sm:$0xff]
    %v72 = vld [vmem:[#allocation5 + $0x68] sm:$0xff]
    %v73 = vld [vmem:[#allocation5 + $0x70] sm:$0xff]
    %v74 = vld [vmem:[#allocation5 + $0x78] sm:$0xff]
    %v75 = vld [vmem:[%s2] sm:$0x1]
    %v77 = vlaneseq
    %v78 = vshrl.u32 %v77, 7
    %v79 = vsub.s32 0, %v78
    %v80 = vrot.slane %v75, %v79
    %82 = vmatprep.subr.mxu0 0.0
    %83 = vmatpush1.msra.mxu0 %v59
    %84 = vmatprep.subr.mxu0 0.0
    %85 = vmatpush1.msra.mxu0 %v60
    %86 = vmatprep.subr.mxu0 0.0
    %87 = vmatpush1.msra.mxu0 %v61
    %88 = vmatprep.subr.mxu0 0.0
    %89 = vmatpush1.msra.mxu0 %v62
    %90 = vmatprep.subr.mxu0 0.0
    %91 = vmatpush1.msra.mxu0 %v63
    %92 = vmatprep.subr.mxu0 0.0
    %93 = vmatpush1.msra.mxu0 %v64
    %94 = vmatprep.subr.mxu0 0.0
    %95 = vmatpush1.msra.mxu0 %v65
    %96 = vmatprep.subr.mxu0 0.0
    %97 = vmatpush1.msra.mxu0 %v66
    %98 = vmatprep.subr.mxu0 0.0
    %99 = vmatpush1.msra.mxu0 %v67
    %100 = vmatprep.subr.mxu0 0.0
    %101 = vmatpush1.msra.mxu0 %v68
    %102 = vmatprep.subr.mxu0 0.0
    %103 = vmatpush1.msra.mxu0 %v69
    %104 = vmatprep.subr.mxu0 0.0
    %105 = vmatpush1.msra.mxu0 %v70
    %106 = vmatprep.subr.mxu0 0.0
    %107 = vmatpush1.msra.mxu0 %v71
    %108 = vmatprep.subr.mxu0 0.0
    %109 = vmatpush1.msra.mxu0 %v72
    %110 = vmatprep.subr.mxu0 0.0
    %111 = vmatpush1.msra.mxu0 %v73
    %112 = vmatprep.subr.mxu0 0.0
    %113 = vmatpush1.msra.mxu0 %v74
    %114 = vmatprep.subr.mxu0 0.0
    %115 = vmatpush1.msra.mxu0 0.0
    %116 = vmatprep.subr.mxu0 0.0
    %117 = vmatpush1.msra.mxu0 0.0
    %118 = vmatprep.subr.mxu0 0.0
    %119 = vmatpush1.msra.mxu0 0.0
    %120 = vmatprep.subr.mxu0 0.0
    %121 = vmatpush1.msra.mxu0 0.0
    %122 = vmatprep.subr.mxu0 0.0
    %123 = vmatpush1.msra.mxu0 0.0
    %124 = vmatprep.subr.mxu0 0.0
    %125 = vmatpush1.msra.mxu0 0.0
    %126 = vmatprep.subr.mxu0 0.0
    %127 = vmatpush1.msra.mxu0 0.0
    %128 = vmatprep.subr.mxu0 0.0
    %129 = vmatpush1.msra.mxu0 0.0
    %130 = vmatprep.subr.mxu0 0.0
    %131 = vmatpush1.msra.mxu0 0.0
    %132 = vmatprep.subr.mxu0 0.0
    %133 = vmatpush1.msra.mxu0 0.0
    %134 = vmatprep.subr.mxu0 0.0
    %135 = vmatpush1.msra.mxu0 0.0
    %136 = vmatprep.subr.mxu0 0.0
    %137 = vmatpush1.msra.mxu0 0.0
    %138 = vmatprep.subr.mxu0 0.0
    %139 = vmatpush1.msra.mxu0 0.0
    %140 = vmatprep.subr.mxu0 0.0
    %141 = vmatpush1.msra.mxu0 0.0
    %142 = vmatprep.subr.mxu0 0.0
    %143 = vmatpush1.msra.mxu0 0.0
    %144 = vmatprep.subr.mxu0 0.0
    %145 = vmatpush1.msra.mxu0 0.0
    %146 = vmatprep.mubr.f32.mxu0 0.0
    %147 = vmatmul.mubr.f32.gmra.mrb[0].mxu0 %v43
    %v148 = vpop.f32.mrb[0].mxu0
    %v149 = vadd.f32 %v80, %v148
    %v150 = vpop.f32.mrb[0].mxu0
    %151 = vmatprep.mubr.f32.mxu0 0.0
    %152 = vmatmul.mubr.f32.gmra.mrb[0].mxu0 %v44
    %v153 = vpop.f32.mrb[0].mxu0
    %v154 = vadd.f32 %v80, %v153
    %v155 = vpop.f32.mrb[0].mxu0
    %156 = vmatprep.mubr.f32.mxu0 0.0
    %157 = vmatmul.mubr.f32.gmra.mrb[0].mxu0 %v45
    %v158 = vpop.f32.mrb[0].mxu0
    %v159 = vadd.f32 %v80, %v158
    %v160 = vpop.f32.mrb[0].mxu0
    %161 = vmatprep.mubr.f32.mxu0 0.0
    %162 = vmatmul.mubr.f32.gmra.mrb[0].mxu0 %v46
    %v163 = vpop.f32.mrb[0].mxu0
    %v164 = vadd.f32 %v80, %v163
    %v165 = vpop.f32.mrb[0].mxu0
    %166 = vmatprep.mubr.f32.mxu0 0.0
    %167 = vmatmul.mubr.f32.gmra.mrb[0].mxu0 %v47
    %v168 = vpop.f32.mrb[0].mxu0
    %v169 = vadd.f32 %v80, %v168
    %v170 = vpop.f32.mrb[0].mxu0
    %171 = vmatprep.mubr.f32.mxu0 0.0
    %172 = vmatmul.mubr.f32.gmra.mrb[0].mxu0 %v48
    %v173 = vpop.f32.mrb[0].mxu0
    %v174 = vadd.f32 %v80, %v173
    %v175 = vpop.f32.mrb[0].mxu0
    %176 = vmatprep.mubr.f32.mxu0 0.0
    %177 = vmatmul.mubr.f32.gmra.mrb[0].mxu0 %v49
    %v178 = vpop.f32.mrb[0].mxu0
    %v179 = vadd.f32 %v80, %v178
    %v180 = vpop.f32.mrb[0].mxu0
    %181 = vmatprep.mubr.f32.mxu0 0.0
    %182 = vmatmul.mubr.f32.gmra.mrb[0].mxu0 %v50
    %v183 = vpop.f32.mrb[0].mxu0
    %v184 = vadd.f32 %v80, %v183
    %v185 = vpop.f32.mrb[0].mxu0
    %186 = vmatprep.mubr.f32.mxu0 0.0
    %187 = vmatmul.mubr.f32.gmra.mrb[0].mxu0 %v51
    %v188 = vpop.f32.mrb[0].mxu0
    %v189 = vadd.f32 %v80, %v188
    %v190 = vpop.f32.mrb[0].mxu0
    %191 = vmatprep.mubr.f32.mxu0 0.0
    %192 = vmatmul.mubr.f32.gmra.mrb[0].mxu0 %v52
    %v193 = vpop.f32.mrb[0].mxu0
    %v194 = vadd.f32 %v80, %v193
    %v195 = vpop.f32.mrb[0].mxu0
    %196 = vmatprep.mubr.f32.mxu0 0.0
    %197 = vmatmul.mubr.f32.gmra.mrb[0].mxu0 %v53
    %v198 = vpop.f32.mrb[0].mxu0
    %v199 = vadd.f32 %v80, %v198
    %v200 = vpop.f32.mrb[0].mxu0
    %201 = vmatprep.mubr.f32.mxu0 0.0
    %202 = vmatmul.mubr.f32.gmra.mrb[0].mxu0 %v54
    %v203 = vpop.f32.mrb[0].mxu0
    %v204 = vadd.f32 %v80, %v203
    %v205 = vpop.f32.mrb[0].mxu0
    %206 = vmatprep.mubr.f32.mxu0 0.0
    %207 = vmatmul.mubr.f32.gmra.mrb[0].mxu0 %v55
    %v208 = vpop.f32.mrb[0].mxu0
    %v209 = vadd.f32 %v80, %v208
    %v210 = vpop.f32.mrb[0].mxu0
    %211 = vmatprep.mubr.f32.mxu0 0.0
    %212 = vmatmul.mubr.f32.gmra.mrb[0].mxu0 %v56
    %v213 = vpop.f32.mrb[0].mxu0
    %v214 = vadd.f32 %v80, %v213
    %v215 = vpop.f32.mrb[0].mxu0
    %216 = vmatprep.mubr.f32.mxu0 0.0
    %217 = vmatmul.mubr.f32.gmra.mrb[0].mxu0 %v57
    %v218 = vpop.f32.mrb[0].mxu0
    %v219 = vadd.f32 %v80, %v218
    %v220 = vpop.f32.mrb[0].mxu0
    %221 = vmatprep.mubr.f32.mxu0 0.0
    %222 = vmatmul.mubr.f32.gmra.mrb[0].mxu0 %v58
    %v223 = vpop.f32.mrb[0].mxu0
    %v224 = vadd.f32 %v80, %v223
    %v225 = vpop.f32.mrb[0].mxu0
    %226 = vdwg.mxu0
    %227 = vst [vmem:[#allocation7] sm:$0xff] %v149
    %228 = vst [vmem:[#allocation7 + $0x8] sm:$0xff] %v154
    %229 = vst [vmem:[#allocation7 + $0x10] sm:$0xff] %v159
    %230 = vst [vmem:[#allocation7 + $0x18] sm:$0xff] %v164
    %231 = vst [vmem:[#allocation7 + $0x20] sm:$0xff] %v169
    %232 = vst [vmem:[#allocation7 + $0x28] sm:$0xff] %v174
    %233 = vst [vmem:[#allocation7 + $0x30] sm:$0xff] %v179
    %234 = vst [vmem:[#allocation7 + $0x38] sm:$0xff] %v184
    %235 = vst [vmem:[#allocation7 + $0x40] sm:$0xff] %v189
    %236 = vst [vmem:[#allocation7 + $0x48] sm:$0xff] %v194
    %237 = vst [vmem:[#allocation7 + $0x50] sm:$0xff] %v199
    %238 = vst [vmem:[#allocation7 + $0x58] sm:$0xff] %v204
    %239 = vst [vmem:[#allocation7 + $0x60] sm:$0xff] %v209
    %240 = vst [vmem:[#allocation7 + $0x68] sm:$0xff] %v214
    %241 = vst [vmem:[#allocation7 + $0x70] sm:$0xff] %v219
    %242 = vst [vmem:[#allocation7 + $0x78] sm:$0xff] %v224
    // Predicated region
    $region22: #{tpu_custom_call.1} parent=1 // pred_check
      _
    $region23: #{tpu_custom_call.1} parent=1 // pred_check_branch
      %244 = sbr.rel (0) target = $region25
    $region24: #{tpu_custom_call.1} parent=1 // pred_region
      %s246 = ssub.s32 2048, 2048
      %247 = vsyncadd [#allocation4], %s246
      %s248 = sshll.u32 [#allocation7], 4
      %s249 = int_to_ptr.vmem [resolvable:$true] %s248
      %254 = dma.vmem_to_hbm [thread:$0]  %s249, 2048, %s3, [#allocation4], 128, 128, 8
    $region25: #{tpu_custom_call.1} parent=1 // pred_fallthru
      _
    // Predicated region
    $region26: #{tpu_custom_call.1} parent=1 // pred_check
      _
    $region27: #{tpu_custom_call.1} parent=1 // pred_check_branch
      %256 = sbr.rel (0) target = $region29
    $region28: #{tpu_custom_call.1} parent=1 // pred_region
      %257 = dma.done [#allocation4], 2048
    $region29: #{tpu_custom_call.1} parent=1 // pred_fallthru
      _
    %258 = vsyncpa [#allocation3], 1
    %259 = vsyncpa [#allocation6], 1
    %260 = vsyncpa [#allocation4], 1

</llo_original>
